<compile_context>
chip_gen: v6e
topology: v6e:2x2x1
jax: 0.10.0
libtpu: 0.0.40
codegen_flags: <defaults>
</compile_context>

<pallas_src>
import jax
import jax.numpy as jnp
from jax.experimental import pallas as pl
from jax.experimental.pallas import tpu as pltpu


def _round_up(a: int, b: int) -> int:
    return ((a + b - 1) // b) * b


def _pick_tm(M: int, tm_max: int) -> int:
    """Largest M-tile (multiple of 8, <= tm_max) that divides M, preferring an even
    tile count >= 2 so v7x's two TensorCores shard the 1-D grid evenly. Falls back
    to a padded tile when nothing divides."""
    cands = [c for c in (1024, 512, 256, 128, 64, 32, 16, 8) if c <= tm_max] or [8]
    divisors = [c for c in cands if M % c == 0]
    for c in divisors:
        n = M // c
        if n >= 2 and n % 2 == 0:
            return c
    if divisors:
        return divisors[0]
    return min(max(cands), _round_up(M, 8))


def _patch_embed_kernel(p_ref, w_ref, b_ref, o_ref):
    # p_ref: (tm, K) bf16 patch rows; w_ref: (K, E) bf16 (VMEM-resident across the grid);
    # b_ref: (1, E) f32; o_ref: (tm, E). MXU matmul, f32 accumulation, minimal epilogue.
    acc = jnp.dot(p_ref[...], w_ref[...], preferred_element_type=jnp.float32)
    o_ref[...] = (acc + b_ref[...]).astype(o_ref.dtype)


def patch_embed(x, weight, bias, patch_size, *, tm_max=512,
                compute_dtype=jnp.bfloat16, out_dtype=None):
    """x: (B, C, H, W) NCHW (PyTorch layout). weight: (E, C, P, P). bias: (E,).
    Returns (B, Np, E) with Np = (H//P)*(W//P)."""
    B, C, H, W = x.shape
    E = weight.shape[0]
    P = patch_size
    Hp, Wp = H // P, W // P
    Np = Hp * Wp
    M = B * Np
    K = C * P * P
    # bf16 output (out_dtype=jnp.bfloat16) cuts the dominant output HBM stream ~2x
    # when downstream tolerates it; default preserves the input dtype.
    out_dtype = x.dtype if out_dtype is None else out_dtype

    # --- Patch extraction (pure layout), kept in XLA but in bf16 to halve this pass. ---
    # TODO(synk): fuse extraction into the kernel (grid over (B, Hp), in-VMEM
    # (C,P,Wp,P)->(Wp,K) reorder via pltpu.einshape) to remove the extra activation pass.
    patches = (x.astype(compute_dtype)
                 .reshape(B, C, Hp, P, Wp, P)
                 .transpose(0, 2, 4, 1, 3, 5)
                 .reshape(M, K))

    # One-time tiny (K*E) transpose+cast; hoist to init time if calling repeatedly.
    w_mat = weight.reshape(E, K).T.astype(compute_dtype)   # (K, E) bf16
    b_mat = bias.astype(jnp.float32).reshape(1, E)         # f32 epilogue

    # --- M tiling (E is NOT gridded: full weight + bias stay resident in VMEM). ---
    tm = _pick_tm(M, tm_max)
    M_pad = _round_up(M, tm)
    if M_pad != M:
        patches = jnp.pad(patches, ((0, M_pad - M), (0, 0)))

    grid = (M_pad // tm,)

    # VMEM budget: 2x each pipelined buffer (Pallas double-buffers), + headroom,
    # capped at 48 MiB so it is safe on v7x's 64 MiB physical VMEM (and v5e/v6e's 128 MiB).
    csize = jnp.dtype(compute_dtype).itemsize
    osize = jnp.dtype(out_dtype).itemsize
    buf_bytes = (2 * tm * K * csize        # patch tiles (double-buffered)
                 + 2 * K * E * csize       # resident weight (conservatively counted 2x)
                 + 2 * E * 4               # bias
                 + 2 * tm * E * osize)     # output tiles
    vmem_limit = int(min(48 << 20, max(16 << 20, buf_bytes + (8 << 20))))

    out = pl.pallas_call(
        _patch_embed_kernel,
        out_shape=jax.ShapeDtypeStruct((M_pad, E), out_dtype),
        grid_spec=pltpu.PrefetchScalarGridSpec(
            num_scalar_prefetch=0,
            grid=grid,
            in_specs=[
                pl.BlockSpec((tm, K), lambda i: (i, 0)),   # patch rows stream over M
                pl.BlockSpec((K, E), lambda i: (0, 0)),    # weight: constant block -> resident
                pl.BlockSpec((1, E), lambda i: (0, 0)),    # bias: resident
            ],
            out_specs=pl.BlockSpec((tm, E), lambda i: (i, 0)),
        ),
        compiler_params=pltpu.CompilerParams(
            dimension_semantics=("parallel",),
            vmem_limit_bytes=vmem_limit,
        ),
    )(patches, w_mat, b_mat)

    if M_pad != M:
        out = out[:M]
    return out.reshape(B, Np, E)


if __name__ == "__main__":
    # Small, module-consistent shapes (E < 128 exercises full-extent lane blocks,
    # M = 32 exercises the divisor-based tm selection with an even 2-tile grid).
    B, C, H, W = 2, 3, 16, 16
    patch_size = 4
    embed_dim = 32

    key = jax.random.PRNGKey(0)
    kx, kw, kb = jax.random.split(key, 3)

    x = jax.random.normal(kx, (B, C, H, W), dtype=jnp.float32)
    # Deterministic synthetic parameters (no checkpoint load).
    weight = jax.random.normal(kw, (embed_dim, C, patch_size, patch_size),
                               dtype=jnp.float32) * 0.02
    bias = jax.random.normal(kb, (embed_dim,), dtype=jnp.float32) * 0.01

    out = patch_embed(x, weight, bias, patch_size)
    out = jax.block_until_ready(out)

    Hp, Wp = H // patch_size, W // patch_size
    Np = Hp * Wp

    # Reference 1: same bf16 operand rounding, f32 accumulation (tight check of the kernel).
    xb = x.astype(jnp.bfloat16).astype(jnp.float32)
    wb = weight.astype(jnp.bfloat16).astype(jnp.float32)
    rp = xb.reshape(B, C, Hp, patch_size, Wp, patch_size)
    rp = rp.transpose(0, 2, 4, 1, 3, 5).reshape(B, Np, -1)
    ref_bf16 = rp @ wb.reshape(embed_dim, -1).T + bias

    # Reference 2: full-f32 Conv2d math (loose check covering bf16 operand rounding).
    rp32 = x.reshape(B, C, Hp, patch_size, Wp, patch_size)
    rp32 = rp32.transpose(0, 2, 4, 1, 3, 5).reshape(B, Np, -1)
    ref_f32 = rp32 @ weight.reshape(embed_dim, -1).T + bias

    assert out.shape == (B, Np, embed_dim)
    assert jnp.allclose(out, ref_bf16, atol=1e-3, rtol=1e-3), "bf16-consistent mismatch"
    assert jnp.allclose(out, ref_f32, atol=5e-2, rtol=5e-2), "f32 reference mismatch"

    print("KERNEL_OK")
</pallas_src>

<mosaic_0001>
module attributes {stable_mosaic.version = 11 : i64} {
  func.func @_patch_embed_kernel(%arg0: i32, %arg1: memref<16x48xbf16, #tpu.memory_space<vmem>>, %arg2: memref<48x32xbf16, #tpu.memory_space<vmem>>, %arg3: memref<1x32xf32, #tpu.memory_space<vmem>>, %arg4: memref<16x32xf32, #tpu.memory_space<vmem>>) attributes {dimension_semantics = [#tpu.dimension_semantics<parallel>], iteration_bounds = array<i64: 2>, scalar_prefetch = 0 : i64, scratch_operands = 0 : i64, tpu.core_type = #tpu.core_type<tc>, window_params = [{transform_indices = @transform_0, window_bounds = array<i64: 16, 48>}, {pipeline_mode = #tpu.pipeline_mode<synchronous>, transform_indices = @transform_1, window_bounds = array<i64: 48, 32>}, {pipeline_mode = #tpu.pipeline_mode<synchronous>, transform_indices = @transform_2, window_bounds = array<i64: 1, 32>}, {transform_indices = @transform_3, window_bounds = array<i64: 16, 32>}]} {
    %c0 = arith.constant 0 : index
    %c0_0 = arith.constant 0 : index
    %0 = vector.load %arg1[%c0, %c0_0] : memref<16x48xbf16, #tpu.memory_space<vmem>>, vector<16x48xbf16>
    %c0_1 = arith.constant 0 : index
    %c0_2 = arith.constant 0 : index
    %1 = vector.load %arg2[%c0_1, %c0_2] : memref<48x32xbf16, #tpu.memory_space<vmem>>, vector<48x32xbf16>
    %cst = arith.constant dense<0.000000e+00> : vector<16x32xf32>
    %2 = tpu.matmul %0, %1, %cst {dimension_numbers = #tpu.dot_dimension_numbers<[1], [0], [0], [1], [0, 0, 1, 1], [], []>} : vector<16x48xbf16>, vector<48x32xbf16>, vector<16x32xf32> -> vector<16x32xf32>
    %c0_3 = arith.constant 0 : index
    %c0_4 = arith.constant 0 : index
    %3 = vector.load %arg3[%c0_3, %c0_4] : memref<1x32xf32, #tpu.memory_space<vmem>>, vector<1x32xf32>
    %4 = vector.broadcast %3 : vector<1x32xf32> to vector<16x32xf32>
    %5 = arith.addf %2, %4 : vector<16x32xf32>
    %c0_5 = arith.constant 0 : index
    %c0_6 = arith.constant 0 : index
    %6 = vector.load %arg4[%c0_5, %c0_6] : memref<16x32xf32, #tpu.memory_space<vmem>>, vector<16x32xf32>
    tpu.vector_store %arg4[%c0_5, %c0_6], %5 {strides = array<i32>} : memref<16x32xf32, #tpu.memory_space<vmem>>, vector<16x32xf32>,
    return
  }
  func.func @transform_0(%arg0: i32) -> (i32, i32) {
    %c0_i32 = arith.constant 0 : i32
    %c0_i32_0 = arith.constant 0 : i32
    return %arg0, %c0_i32 : i32, i32
  }
  func.func @transform_1(%arg0: i32) -> (i32, i32) {
    %c0_i32 = arith.constant 0 : i32
    %c0_i32_0 = arith.constant 0 : i32
    %c0_i32_1 = arith.constant 0 : i32
    return %c0_i32, %c0_i32_0 : i32, i32
  }
  func.func @transform_2(%arg0: i32) -> (i32, i32) {
    %c0_i32 = arith.constant 0 : i32
    %c0_i32_0 = arith.constant 0 : i32
    %c0_i32_1 = arith.constant 0 : i32
    return %c0_i32, %c0_i32_0 : i32, i32
  }
  func.func @transform_3(%arg0: i32) -> (i32, i32) {
    %c0_i32 = arith.constant 0 : i32
    %c0_i32_0 = arith.constant 0 : i32
    return %arg0, %c0_i32 : i32, i32
  }
}

</mosaic_0001>

<llo_original>
// kernel: tpu_custom_call.1
$region0: #{tpu_custom_call.1}
  #allocation0 [shape = 'u32[]', space=smem, size = 0x4, offset = 0x4, fixed_abs, tag = 'smem constant byte address 0x4 - core index']
  #allocation1 [shape = 'u32[144,128]{1,0:T(1,128)}', space=vmem, size = 0x12000, scoped, tag = 'internal scratch']
  %s0 = inlined_call_operand.vmem [shape: bf16[32,48], index: 0, kind: input, shape index: {}]
  %s1 = inlined_call_operand.vmem [shape: bf16[48,32], index: 1, kind: input, shape index: {}]
  %s2 = inlined_call_operand.vmem [shape: f32[1,32], index: 2, kind: input, shape index: {}]
  %s3 = inlined_call_operand.hbm [shape: f32[32,32], index: 3, kind: output, shape index: {}]
  %s4 = sld [smem:[#allocation0]]
  $region45: #{tpu_custom_call.1} parent=0
    _
  %s6 = ssub.s32 1, %s4
  %s7 = scalar_select 0, %s6, %s4
  $region1: #{tpu_custom_call.1} parent=0
    #allocation2 [shape = 'u8[16384]{0}', space=vmem, size = 0x4000, scoped, tag = 'output window, operand 0']
    #allocation3 [shape = 's32[2]{0}', space=sflag, size = 0x8, scoped, tag = 'scoped memory for tpu_custom_call.1']
    %8 = vsyncpa [#allocation3], 0
    %s9 = scalar_lea.sflag [#allocation3], 1
    %10 = vsyncpa %s9, 0
    loop: start=0, step=1, limit=4
    $region2: #{tpu_custom_call.1} parent=1 // loop_pre_header
      _
    $region3: #{tpu_custom_call.1} parent=1 // loop_header
      %s12 = sphi 0, %s16
      %p13 = scmp.ge.s32.totalorder %s12, 4
      %s22 = sphi 0, %s24
      %s25 = sphi 0, %s22
      %s26 = sphi 0, %s25
      %s42 = sphi 0, %s26
      %s46 = sphi 0, %s46
      %s48 = sphi 0, %s46
      %s49 = sphi 0, %s48
      %s63 = sphi 0, %s49
      %s67 = sphi 0, %s67
      %s69 = sphi 0, %s67
      %s70 = sphi 0, %s69
      %s84 = sphi 0, %s70
      %s90 = sphi 0, %s92
      %s93 = sphi 0, %s90
      %s94 = sphi 0, %s93
      %s110 = sphi 0, %s94
    $region4: #{tpu_custom_call.1} parent=1 // loop_header_branch
      %15 = sbr.rel (%p13) target = $region8
    $region5: #{tpu_custom_call.1} parent=1 // loop_body
      %s17 = ssub.s32 %s12, 1
      %s18 = ssub.s32 %s12, 2
      %s19 = sadd.s32 %s12, 1
      %s20 = ssub.s32 %s12, %s19
      %p21 = scmp.eq.s32.totalorder %s20, 0
      %s23 = sadd.s32 %s22, 1
      %s24 = scalar_select %p21, %s22, %s23
      %p27 = pneg %p21
      %p28 = scmp.eq.s32.totalorder %s12, 1
      %p29 = por %p27, %p28
      %p30 = scmp.ne.s32.totalorder %s22, %s25
      %p31 = scmp.eq.s32.totalorder %s12, 0
      %p32 = por %p30, %p31
      %p33 = scmp.ne.s32.totalorder %s22, %s25
      %p34 = scmp.eq.s32.totalorder %s17, 1
      %p35 = por %p33, %p34
      %p36 = scmp.ne.s32.totalorder %s25, %s26
      %p37 = scmp.eq.s32.totalorder %s17, 0
      %p38 = por %p36, %p37
      %p39 = scmp.ne.s32.totalorder %s25, %s26
      %p40 = scmp.eq.s32.totalorder %s18, 1
      %p41 = por %p39, %p40
      %p43 = scmp.ne.s32.totalorder %s26, %s42
      %p44 = scmp.eq.s32.totalorder %s18, 0
      %p45 = por %p43, %p44
      %s47 = sadd.s32 %s46, 1
      %p50 = scmp.eq.s32.totalorder %s12, 1
      %p51 = scmp.ne.s32.totalorder %s46, %s48
      %p52 = scmp.eq.s32.totalorder %s12, 0
      %p53 = por %p51, %p52
      %p54 = scmp.ne.s32.totalorder %s46, %s48
      %p55 = scmp.eq.s32.totalorder %s17, 1
      %p56 = por %p54, %p55
      %p57 = scmp.ne.s32.totalorder %s48, %s49
      %p58 = scmp.eq.s32.totalorder %s17, 0
      %p59 = por %p57, %p58
      %p60 = scmp.ne.s32.totalorder %s48, %s49
      %p61 = scmp.eq.s32.totalorder %s18, 1
      %p62 = por %p60, %p61
      %p64 = scmp.ne.s32.totalorder %s49, %s63
      %p65 = scmp.eq.s32.totalorder %s18, 0
      %p66 = por %p64, %p65
      %s68 = sadd.s32 %s67, 1
      %p71 = scmp.eq.s32.totalorder %s12, 1
      %p72 = scmp.ne.s32.totalorder %s67, %s69
      %p73 = scmp.eq.s32.totalorder %s12, 0
      %p74 = por %p72, %p73
      %p75 = scmp.ne.s32.totalorder %s67, %s69
      %p76 = scmp.eq.s32.totalorder %s17, 1
      %p77 = por %p75, %p76
      %p78 = scmp.ne.s32.totalorder %s69, %s70
      %p79 = scmp.eq.s32.totalorder %s17, 0
      %p80 = por %p78, %p79
      %p81 = scmp.ne.s32.totalorder %s69, %s70
      %p82 = scmp.eq.s32.totalorder %s18, 1
      %p83 = por %p81, %p82
      %p85 = scmp.ne.s32.totalorder %s70, %s84
      %p86 = scmp.eq.s32.totalorder %s18, 0
      %p87 = por %p85, %p86
      %s88 = ssub.s32 %s12, %s19
      %p89 = scmp.eq.s32.totalorder %s88, 0
      %s91 = sadd.s32 %s90, 1
      %s92 = scalar_select %p89, %s90, %s91
      %p95 = pneg %p89
      %p96 = scmp.eq.s32.totalorder %s12, 1
      %p97 = por %p95, %p96
      %p98 = scmp.ne.s32.totalorder %s90, %s93
      %p99 = scmp.eq.s32.totalorder %s12, 0
      %p100 = por %p98, %p99
      %p101 = scmp.ne.s32.totalorder %s90, %s93
      %p102 = scmp.eq.s32.totalorder %s17, 1
      %p103 = por %p101, %p102
      %p104 = scmp.ne.s32.totalorder %s93, %s94
      %p105 = scmp.eq.s32.totalorder %s17, 0
      %p106 = por %p104, %p105
      %p107 = scmp.ne.s32.totalorder %s93, %s94
      %p108 = scmp.eq.s32.totalorder %s18, 1
      %p109 = por %p107, %p108
      %p111 = scmp.ne.s32.totalorder %s94, %s110
      %p112 = scmp.eq.s32.totalorder %s18, 0
      %p113 = por %p111, %p112
      %p114 = scmp.le.s32.totalorder 1, %s12
      %p115 = scmp.lt.s32.totalorder %s12, 3
      %p116 = pnand %p114, %p115
      %p117 = pneg %p116
      // Predicated region
      $region9: #{tpu_custom_call.1} parent=5 // pred_check
        _
      $region10: #{tpu_custom_call.1} parent=5 // pred_check_branch
        %119 = sbr.rel (%p116) target = $region12
      $region11: #{tpu_custom_call.1} parent=5 // pred_region
        %s120 = ssub.s32 %s12, 1
        // Predicated region
        $region13: #{tpu_custom_call.1} parent=11 // pred_check
          %p121 = pneg %p59
        $region14: #{tpu_custom_call.1} parent=11 // pred_check_branch
          %123 = sbr.rel (%p121) target = $region16
        $region15: #{tpu_custom_call.1} parent=11 // pred_region
          _
        $region16: #{tpu_custom_call.1} parent=11 // pred_fallthru
          _
        // Predicated region
        $region17: #{tpu_custom_call.1} parent=11 // pred_check
          %p124 = pneg %p80
        $region18: #{tpu_custom_call.1} parent=11 // pred_check_branch
          %126 = sbr.rel (%p124) target = $region20
        $region19: #{tpu_custom_call.1} parent=11 // pred_region
          _
        $region20: #{tpu_custom_call.1} parent=11 // pred_fallthru
          _
      $region12: #{tpu_custom_call.1} parent=5 // pred_fallthru
        _
      %p127 = scmp.lt.s32.totalorder %s12, 2
      // Predicated region
      $region21: #{tpu_custom_call.1} parent=5 // pred_check
        %p128 = pneg %p127
      $region22: #{tpu_custom_call.1} parent=5 // pred_check_branch
        %130 = sbr.rel (%p128) target = $region24
      $region23: #{tpu_custom_call.1} parent=5 // pred_region
        // Predicated region
        $region25: #{tpu_custom_call.1} parent=23 // pred_check
          %p131 = pneg %p32
        $region26: #{tpu_custom_call.1} parent=23 // pred_check_branch
          %133 = sbr.rel (%p131) target = $region28
        $region27: #{tpu_custom_call.1} parent=23 // pred_region
          %s134 = smul.u32 2, %s12
          %p135 = scmp.lt.s32.totalorder %s134, 3
          %s136 = scalar_select %p135, %s134, 3
          %s137 = smul.addr %s136, 4
          %s138 = scalar_lea.vmem %s0, %s137
          %s139 = smul.u32 2, %s12
        $region28: #{tpu_custom_call.1} parent=23 // pred_fallthru
          _
      $region24: #{tpu_custom_call.1} parent=5 // pred_fallthru
        _
      %p140 = scmp.le.s32.totalorder 1, %s12
      %p141 = scmp.lt.s32.totalorder %s12, 3
      %p142 = pnand %p140, %p141
      %p143 = pneg %p142
      // Predicated region
      $region29: #{tpu_custom_call.1} parent=5 // pred_check
        _
      $region30: #{tpu_custom_call.1} parent=5 // pred_check_branch
        %145 = sbr.rel (%p142) target = $region32
      $region31: #{tpu_custom_call.1} parent=5 // pred_region
        %s146 = ssub.s32 %s12, 1
        %s147 = smul.u32 2, %s17
        %p148 = scmp.lt.s32.totalorder %s147, 3
        %s149 = scalar_select %p148, %s147, 3
        %s150 = smul.addr %s149, 4
        %s151 = scalar_lea.vmem %s0, %s150
        %p152 = pneg %p38
        %p153 = pneg %p35
        %p154 = pneg %p59
        %p155 = pneg %p56
        %p156 = pneg %p80
        %p157 = pneg %p77
        %p158 = pneg %p106
        %p159 = pneg %p103
        %s160 = sand.u32 %s93, 1
        %s161 = scalar_lea.sflag [#allocation3], %s160
        %s162 = sand.u32 %s93, 1
        %s163 = smul.addr %s162, 16
        %s164 = scalar_lea.vmem [#allocation2], %s163
        %s165 = smul.u32 2, %s17
        %p166 = scmp.lt.s32.totalorder %s165, 3
        %s167 = scalar_select %p166, %s165, 3
        %s168 = smul.addr %s167, 4
        %s169 = scalar_lea.vmem %s0, %s168
        %s170 = smul.u32 2, %s17
        %s171 = smul.u32 2, %s17
        %v173 = vld [vmem:[%s169] sm:$0xf]
        %v174 = vld [vmem:[%s169 + $0x4] sm:$0xf]
        %v175 = vld [vmem:[%s1] sm:$0xf]
        %v176 = vld [vmem:[%s1 + $0x4] sm:$0xf]
        %v177 = vld [vmem:[%s1 + $0x8] sm:$0xf]
        %v178 = vld [vmem:[%s1 + $0xc] sm:$0xf]
        %v179 = vld [vmem:[%s1 + $0x10] sm:$0xf]
        %v180 = vld [vmem:[%s1 + $0x14] sm:$0xf]
        %v181 = vld [vmem:[%s2] sm:$0x1]
        %v183 = vlaneseq
        %v184 = vshrl.u32 %v183, 7
        %v185 = vsub.s32 0, %v184
        %v186 = vrot.slane %v181, %v185
        %v190 = vunpack.c.l.b16 %v173
        %v191 = vunpack.c.l.b16 %v174
        %v192 = vpack.c.b16 %v191, %v190
        %v199 = vunpack.c.l.b16 %v175
        %v200 = vunpack.c.l.b16 %v176
        %v201 = vunpack.c.l.b16 %v177
        %v202 = vunpack.c.l.b16 %v178
        %v203 = vunpack.c.l.b16 %v179
        %v204 = vunpack.c.l.b16 %v180
        %v205 = vpack.c.b16 %v200, %v199
        %v206 = vpack.c.b16 %v202, %v201
        %v207 = vpack.c.b16 %v204, %v203
        %vm211 = vcmask 392192
        %v213 = vsel %vm211, %v192, 0
        %215 = vmatprep.subr.bf16.mxu0 0
        %216 = vmatpush1.bf16.msra.mxu0 0
        %217 = vmatprep.subr.bf16.mxu0 0
        %218 = vmatpush1.bf16.msra.mxu0 0
        %219 = vmatprep.subr.bf16.mxu0 0
        %220 = vmatpush1.bf16.msra.mxu0 0
        %221 = vmatprep.subr.bf16.mxu0 0
        %222 = vmatpush1.bf16.msra.mxu0 0
        %223 = vmatprep.subr.bf16.mxu0 0
        %224 = vmatpush1.bf16.msra.mxu0 0
        %225 = vmatprep.subr.bf16.mxu0 0
        %226 = vmatpush1.bf16.msra.mxu0 %v207
        %227 = vmatprep.subr.bf16.mxu0 0
        %228 = vmatpush1.bf16.msra.mxu0 %v206
        %229 = vmatprep.subr.bf16.mxu0 0
        %230 = vmatpush1.bf16.msra.mxu0 %v205
        %231 = vmatprep.subr.bf16.mxu0 0
        %232 = vmatpush2.bf16.msra.mxu0 0
        %233 = vmatprep.subr.bf16.mxu0 0
        %234 = vmatpush2.bf16.msra.mxu0 0
        %235 = vmatprep.subr.bf16.mxu0 0
        %236 = vmatpush2.bf16.msra.mxu0 0
        %237 = vmatprep.subr.bf16.mxu0 0
        %238 = vmatpush2.bf16.msra.mxu0 0
        %239 = vmatprep.subr.bf16.mxu0 0
        %240 = vmatpush2.bf16.msra.mxu0 0
        %241 = vmatprep.subr.bf16.mxu0 0
        %242 = vmatpush2.bf16.msra.mxu0 0
        %243 = vmatprep.subr.bf16.mxu0 0
        %244 = vmatpush2.bf16.msra.mxu0 0
        %245 = vmatprep.subr.bf16.mxu0 0
        %246 = vmatpush2.bf16.msra.mxu0 0
        %247 = vmatprep.mubr.bf16.mxu0 0
        %248 = vmatmul.mubr.bf16.gmra.mxu0 %v213
        %v249 = vpop.f32.mrf.mxu0
        %v250 = vadd.f32 %v186, %v249
        %v251 = vpop.f32.mrf.mxu0
        %v252 = vpop.f32.mrf.mxu0
        %v253 = vadd.f32 %v186, %v252
        %v254 = vpop.f32.mrf.mxu0
        %255 = vdwg.mxu0
        %vm256 = vcmask 261120
        %257 = vst.msk [vmem:[%s164] sm:$0xff] %vm256, %v250
        %258 = vst.msk [vmem:[%s164 + $0x8] sm:$0xff] %vm256, %v253
        %s259 = sand.u32 %s93, 1
        %s260 = scalar_lea.sflag [#allocation3], %s259
        %s261 = sand.u32 %s93, 1
        %s262 = smul.addr %s261, 16
        %s263 = scalar_lea.vmem [#allocation2], %s262
        // Predicated region
        $region33: #{tpu_custom_call.1} parent=31 // pred_check
          %p264 = pneg %p103
        $region34: #{tpu_custom_call.1} parent=31 // pred_check_branch
          %266 = sbr.rel (%p264) target = $region36
        $region35: #{tpu_custom_call.1} parent=31 // pred_region
          %s267 = smul.u32 2, %s17
          %s269 = ssub.s32 256, 256
          %270 = vsyncadd %s260, %s269
          %s271 = smul.addr %s267, 128
          %s272 = scalar_lea.hbm %s3, %s271
          %s273 = sshll.u32 %s263, 4
          %s274 = int_to_ptr.vmem [resolvable:$true] %s273
          %279 = dma.vmem_to_hbm [thread:$0]  %s274, 256, %s272, %s260, 128, 128, 8
        $region36: #{tpu_custom_call.1} parent=31 // pred_fallthru
          _
      $region32: #{tpu_custom_call.1} parent=5 // pred_fallthru
        _
      %p280 = scmp.le.s32.totalorder 2, %s12
      // Predicated region
      $region37: #{tpu_custom_call.1} parent=5 // pred_check
        %p281 = pneg %p280
      $region38: #{tpu_custom_call.1} parent=5 // pred_check_branch
        %283 = sbr.rel (%p281) target = $region40
      $region39: #{tpu_custom_call.1} parent=5 // pred_region
        %s284 = ssub.s32 %s12, 2
        // Predicated region
        $region41: #{tpu_custom_call.1} parent=39 // pred_check
          %p285 = pneg %p109
        $region42: #{tpu_custom_call.1} parent=39 // pred_check_branch
          %287 = sbr.rel (%p285) target = $region44
        $region43: #{tpu_custom_call.1} parent=39 // pred_region
          %s288 = sand.u32 %s94, 1
          %s289 = scalar_lea.sflag [#allocation3], %s288
          %s290 = sand.u32 %s94, 1
          %s291 = smul.addr %s290, 16
          %s292 = scalar_lea.vmem [#allocation2], %s291
          %293 = dma.done %s289, 256
        $region44: #{tpu_custom_call.1} parent=39 // pred_fallthru
          _
      $region40: #{tpu_custom_call.1} parent=5 // pred_fallthru
        _
    $region6: #{tpu_custom_call.1} parent=1 // loop_footer
      %s16 = sadd.s32 1, %s12
    $region7: #{tpu_custom_call.1} parent=1 // loop_footer_branch
      %11 = sbr.rel target = $region3
    $region8: #{tpu_custom_call.1} parent=1 // loop_exit
      _
    %294 = vsyncpa [#allocation3], 1
    %s295 = scalar_lea.sflag [#allocation3], 1
    %296 = vsyncpa %s295, 1

</llo_original>
